<compile_context>
chip_gen: v6e
topology: v6e:2x2x1
jax: 0.10.0
libtpu: 0.0.40
codegen_flags: <defaults>
</compile_context>

<pallas_src>
import jax
import jax.numpy as jnp
from jax import lax
from jax.experimental import pallas as pl
from jax.experimental.pallas import tpu as pltpu  # noqa: F401  (TPU backend)

EPS = 1e-5
HIDDEN = 100
N_OUT = 10
PAD = 128          # lane-aligned feature width
B = 8              # batch


def _bn_train(h, gamma, beta):
    """PyTorch BatchNorm1d training-mode forward (batch mean, biased var).

    Affine folded into a single scale/shift.  Padded lanes have gamma=beta=0
    and h=0 there, so the output stays exactly 0 in padded lanes.
    """
    inv_n = 1.0 / h.shape[0]
    mean = jnp.sum(h, axis=0, keepdims=True) * inv_n
    centered = h - mean
    var = jnp.sum(centered * centered, axis=0, keepdims=True) * inv_n
    scale = gamma * lax.rsqrt(var + EPS)
    return centered * scale + beta


def test_model_kernel(x_ref, w_ref, v_ref, out_ref):
    # x_ref: (B, 128)          padded input
    # w_ref: (4, 128, 128)     [W_fused, W_2a, W_2b, W_heads]
    # v_ref: (10, 128)         [b_fused, g1, be1, b2a, g2a, be2a, b2b, g2b, be2b, b_heads]
    # out_ref: (B, 128)        first 2*N_OUT lanes hold [out1 | out2]
    x = x_ref[...]

    # fused: self.input followed by block_1's Linear (no nonlinearity between)
    h = jnp.dot(x, w_ref[0], preferred_element_type=jnp.float32) + v_ref[0:1, :]
    h = _bn_train(h, v_ref[1:2, :], v_ref[2:3, :])
    h = jnp.maximum(h, 0.0)

    # block_2: Linear -> BN -> (Linear -> BN -> ReLU)
    h = jnp.dot(h, w_ref[1], preferred_element_type=jnp.float32) + v_ref[3:4, :]
    h = _bn_train(h, v_ref[4:5, :], v_ref[5:6, :])
    h = jnp.dot(h, w_ref[2], preferred_element_type=jnp.float32) + v_ref[6:7, :]
    h = _bn_train(h, v_ref[7:8, :], v_ref[8:9, :])
    h = jnp.maximum(h, 0.0)

    # both output heads as one lane-dense matmul + store
    out_ref[...] = (
        jnp.dot(h, w_ref[3], preferred_element_type=jnp.float32) + v_ref[9:10, :]
    )


# ----------------------------------------------------------------------------
# parameter construction / packing
# ----------------------------------------------------------------------------
def init_params(key, hidden=HIDDEN, n_out=N_OUT):
    """Raw parameters mirroring the PyTorch module (Linear weights stored as
    (in, out), biases as (1, out)); BN gamma=1, beta=0 (PyTorch default)."""
    ks = jax.random.split(key, 12)

    def lin(kw, kb, fan_in, fan_out):
        bound = 1.0 / jnp.sqrt(fan_in)
        w = jax.random.uniform(kw, (fan_out, fan_in), jnp.float32, -bound, bound)
        b = jax.random.uniform(kb, (fan_out,), jnp.float32, -bound, bound)
        return w.T, b.reshape(1, fan_out)

    w_in, b_in = lin(ks[0], ks[1], hidden, hidden)
    w1, b1 = lin(ks[2], ks[3], hidden, hidden)
    w2a, b2a = lin(ks[4], ks[5], hidden, hidden)
    w2b, b2b = lin(ks[6], ks[7], hidden, hidden)
    wo1, bo1 = lin(ks[8], ks[9], hidden, n_out)
    wo2, bo2 = lin(ks[10], ks[11], hidden, n_out)

    g1 = jnp.ones((1, hidden), jnp.float32); be1 = jnp.zeros((1, hidden), jnp.float32)
    g2a = jnp.ones((1, hidden), jnp.float32); be2a = jnp.zeros((1, hidden), jnp.float32)
    g2b = jnp.ones((1, hidden), jnp.float32); be2b = jnp.zeros((1, hidden), jnp.float32)

    return (w_in, b_in, w1, b1, g1, be1,
            w2a, b2a, g2a, be2a, w2b, b2b, g2b, be2b,
            wo1, bo1, wo2, bo2)


def pack_params(params, pad=PAD):
    """Fold Linear0+Linear1, concat output heads, zero-pad to 128 lanes and
    stack into two arrays: (4,128,128) weights and (10,128) vectors."""
    (w_in, b_in, w1, b1, g1, be1,
     w2a, b2a, g2a, be2a, w2b, b2b, g2b, be2b,
     wo1, bo1, wo2, bo2) = params

    # x @ w_in + b_in then @ w1 + b1  ==  x @ (w_in @ w1) + (b_in @ w1 + b1)
    w_fused = w_in @ w1
    b_fused = b_in @ w1 + b1

    wo = jnp.concatenate([wo1, wo2], axis=1)   # (hidden, 2*n_out)
    bo = jnp.concatenate([bo1, bo2], axis=1)   # (1, 2*n_out)

    def pad_w(w):
        return jnp.pad(w, ((0, pad - w.shape[0]), (0, pad - w.shape[1])))

    def pad_v(v):
        return jnp.pad(v, ((0, 0), (0, pad - v.shape[1])))

    w_stack = jnp.stack([pad_w(w_fused), pad_w(w2a), pad_w(w2b), pad_w(wo)])
    v_stack = jnp.concatenate(
        [pad_v(b_fused),
         pad_v(g1), pad_v(be1),
         pad_v(b2a), pad_v(g2a), pad_v(be2a),
         pad_v(b2b), pad_v(g2b), pad_v(be2b),
         pad_v(bo)], axis=0)                   # (10, 128)
    return w_stack, v_stack


@jax.jit
def test_model_forward(x, w_stack, v_stack):
    pad = w_stack.shape[-1]
    x_p = jnp.pad(x, ((0, 0), (0, pad - x.shape[1])))
    out = pl.pallas_call(
        test_model_kernel,
        out_shape=jax.ShapeDtypeStruct((x.shape[0], pad), jnp.float32),
    )(x_p, w_stack, v_stack)
    return out[:, :N_OUT], out[:, N_OUT:2 * N_OUT]


# ----------------------------------------------------------------------------
# pure-JAX reference (un-fused, un-padded) for correctness check
# ----------------------------------------------------------------------------
def reference_forward(x, params):
    (w_in, b_in, w1, b1, g1, be1,
     w2a, b2a, g2a, be2a, w2b, b2b, g2b, be2b,
     wo1, bo1, wo2, bo2) = params

    def bn(h, g, b):
        m = jnp.mean(h, axis=0, keepdims=True)
        v = jnp.mean((h - m) ** 2, axis=0, keepdims=True)
        return (h - m) / jnp.sqrt(v + EPS) * g + b

    h = x @ w_in + b_in
    h = jnp.maximum(bn(h @ w1 + b1, g1, be1), 0.0)
    h = bn(h @ w2a + b2a, g2a, be2a)
    h = jnp.maximum(bn(h @ w2b + b2b, g2b, be2b), 0.0)
    return h @ wo1 + bo1, h @ wo2 + bo2


if __name__ == "__main__":
    key = jax.random.PRNGKey(0)
    k_x, k_p = jax.random.split(key)

    x = jax.random.normal(k_x, (B, HIDDEN), jnp.float32)
    params = init_params(k_p, hidden=HIDDEN, n_out=N_OUT)
    w_stack, v_stack = pack_params(params)

    out1, out2 = test_model_forward(x, w_stack, v_stack)
    jax.block_until_ready((out1, out2))

    ref1, ref2 = reference_forward(x, params)
    assert out1.shape == (B, N_OUT) and out2.shape == (B, N_OUT)
    assert jnp.allclose(out1, ref1, atol=1e-4, rtol=1e-4)
    assert jnp.allclose(out2, ref2, atol=1e-4, rtol=1e-4)

    print("KERNEL_OK")
</pallas_src>

<mosaic_0001>
module attributes {stable_mosaic.version = 11 : i64} {
  func.func @test_model_kernel(%arg0: memref<8x128xf32, #tpu.memory_space<vmem>>, %arg1: memref<4x128x128xf32, #tpu.memory_space<vmem>>, %arg2: memref<10x128xf32, #tpu.memory_space<vmem>>, %arg3: memref<8x128xf32, #tpu.memory_space<vmem>>) attributes {dimension_semantics = [], scalar_prefetch = 0 : i64, scratch_operands = 0 : i64, tpu.core_type = #tpu.core_type<tc>} {
    %c0 = arith.constant 0 : index
    %c0_0 = arith.constant 0 : index
    %0 = vector.load %arg0[%c0, %c0_0] : memref<8x128xf32, #tpu.memory_space<vmem>>, vector<8x128xf32>
    %c0_1 = arith.constant 0 : index
    %c0_2 = arith.constant 0 : index
    %c0_3 = arith.constant 0 : index
    %1 = vector.load %arg1[%c0_1, %c0_2, %c0_3] : memref<4x128x128xf32, #tpu.memory_space<vmem>>, vector<1x128x128xf32>
    %2 = vector.shape_cast %1 : vector<1x128x128xf32> to vector<128x128xf32>
    %cst = arith.constant dense<0.000000e+00> : vector<8x128xf32>
    %3 = tpu.matmul %0, %2, %cst {dimension_numbers = #tpu.dot_dimension_numbers<[1], [0], [0], [1], [0, 0, 1, 1], [], []>} : vector<8x128xf32>, vector<128x128xf32>, vector<8x128xf32> -> vector<8x128xf32>
    %c0_4 = arith.constant 0 : index
    %c0_5 = arith.constant 0 : index
    %4 = vector.load %arg2[%c0_4, %c0_5] : memref<10x128xf32, #tpu.memory_space<vmem>>, vector<1x128xf32>
    %5 = vector.broadcast %4 : vector<1x128xf32> to vector<8x128xf32>
    %6 = arith.addf %3, %5 : vector<8x128xf32>
    %c1 = arith.constant 1 : index
    %c0_6 = arith.constant 0 : index
    %7 = vector.load %arg2[%c1, %c0_6] : memref<10x128xf32, #tpu.memory_space<vmem>>, vector<1x128xf32>
    %c2 = arith.constant 2 : index
    %c0_7 = arith.constant 0 : index
    %8 = vector.load %arg2[%c2, %c0_7] : memref<10x128xf32, #tpu.memory_space<vmem>>, vector<1x128xf32>
    %cst_8 = arith.constant dense<0.000000e+00> : vector<128xf32>
    %9 = vector.multi_reduction <add>, %6, %cst_8 [0] : vector<8x128xf32> to vector<128xf32>
    %10 = vector.shape_cast %9 : vector<128xf32> to vector<1x128xf32>
    %cst_9 = arith.constant 1.250000e-01 : f32
    %11 = vector.broadcast %cst_9 : f32 to vector<1x128xf32>
    %12 = arith.mulf %10, %11 : vector<1x128xf32>
    %13 = vector.broadcast %12 : vector<1x128xf32> to vector<8x128xf32>
    %14 = arith.subf %6, %13 : vector<8x128xf32>
    %15 = arith.mulf %14, %14 : vector<8x128xf32>
    %cst_10 = arith.constant dense<0.000000e+00> : vector<128xf32>
    %16 = vector.multi_reduction <add>, %15, %cst_10 [0] : vector<8x128xf32> to vector<128xf32>
    %17 = vector.shape_cast %16 : vector<128xf32> to vector<1x128xf32>
    %cst_11 = arith.constant 1.250000e-01 : f32
    %18 = vector.broadcast %cst_11 : f32 to vector<1x128xf32>
    %19 = arith.mulf %17, %18 : vector<1x128xf32>
    %cst_12 = arith.constant 9.99999974E-6 : f32
    %20 = vector.broadcast %cst_12 : f32 to vector<1x128xf32>
    %21 = arith.addf %19, %20 : vector<1x128xf32>
    %22 = math.rsqrt %21 : vector<1x128xf32>
    %23 = arith.mulf %7, %22 : vector<1x128xf32>
    %24 = vector.broadcast %23 : vector<1x128xf32> to vector<8x128xf32>
    %25 = arith.mulf %14, %24 : vector<8x128xf32>
    %26 = vector.broadcast %8 : vector<1x128xf32> to vector<8x128xf32>
    %27 = arith.addf %25, %26 : vector<8x128xf32>
    %cst_13 = arith.constant 0.000000e+00 : f32
    %28 = vector.broadcast %cst_13 : f32 to vector<8x128xf32>
    %29 = arith.maximumf %27, %28 : vector<8x128xf32>
    %c1_14 = arith.constant 1 : index
    %c0_15 = arith.constant 0 : index
    %c0_16 = arith.constant 0 : index
    %30 = vector.load %arg1[%c1_14, %c0_15, %c0_16] : memref<4x128x128xf32, #tpu.memory_space<vmem>>, vector<1x128x128xf32>
    %31 = vector.shape_cast %30 : vector<1x128x128xf32> to vector<128x128xf32>
    %cst_17 = arith.constant dense<0.000000e+00> : vector<8x128xf32>
    %32 = tpu.matmul %29, %31, %cst_17 {dimension_numbers = #tpu.dot_dimension_numbers<[1], [0], [0], [1], [0, 0, 1, 1], [], []>} : vector<8x128xf32>, vector<128x128xf32>, vector<8x128xf32> -> vector<8x128xf32>
    %c3 = arith.constant 3 : index
    %c0_18 = arith.constant 0 : index
    %33 = vector.load %arg2[%c3, %c0_18] : memref<10x128xf32, #tpu.memory_space<vmem>>, vector<1x128xf32>
    %34 = vector.broadcast %33 : vector<1x128xf32> to vector<8x128xf32>
    %35 = arith.addf %32, %34 : vector<8x128xf32>
    %c4 = arith.constant 4 : index
    %c0_19 = arith.constant 0 : index
    %36 = vector.load %arg2[%c4, %c0_19] : memref<10x128xf32, #tpu.memory_space<vmem>>, vector<1x128xf32>
    %c5 = arith.constant 5 : index
    %c0_20 = arith.constant 0 : index
    %37 = vector.load %arg2[%c5, %c0_20] : memref<10x128xf32, #tpu.memory_space<vmem>>, vector<1x128xf32>
    %cst_21 = arith.constant dense<0.000000e+00> : vector<128xf32>
    %38 = vector.multi_reduction <add>, %35, %cst_21 [0] : vector<8x128xf32> to vector<128xf32>
    %39 = vector.shape_cast %38 : vector<128xf32> to vector<1x128xf32>
    %cst_22 = arith.constant 1.250000e-01 : f32
    %40 = vector.broadcast %cst_22 : f32 to vector<1x128xf32>
    %41 = arith.mulf %39, %40 : vector<1x128xf32>
    %42 = vector.broadcast %41 : vector<1x128xf32> to vector<8x128xf32>
    %43 = arith.subf %35, %42 : vector<8x128xf32>
    %44 = arith.mulf %43, %43 : vector<8x128xf32>
    %cst_23 = arith.constant dense<0.000000e+00> : vector<128xf32>
    %45 = vector.multi_reduction <add>, %44, %cst_23 [0] : vector<8x128xf32> to vector<128xf32>
    %46 = vector.shape_cast %45 : vector<128xf32> to vector<1x128xf32>
    %cst_24 = arith.constant 1.250000e-01 : f32
    %47 = vector.broadcast %cst_24 : f32 to vector<1x128xf32>
    %48 = arith.mulf %46, %47 : vector<1x128xf32>
    %cst_25 = arith.constant 9.99999974E-6 : f32
    %49 = vector.broadcast %cst_25 : f32 to vector<1x128xf32>
    %50 = arith.addf %48, %49 : vector<1x128xf32>
    %51 = math.rsqrt %50 : vector<1x128xf32>
    %52 = arith.mulf %36, %51 : vector<1x128xf32>
    %53 = vector.broadcast %52 : vector<1x128xf32> to vector<8x128xf32>
    %54 = arith.mulf %43, %53 : vector<8x128xf32>
    %55 = vector.broadcast %37 : vector<1x128xf32> to vector<8x128xf32>
    %56 = arith.addf %54, %55 : vector<8x128xf32>
    %c2_26 = arith.constant 2 : index
    %c0_27 = arith.constant 0 : index
    %c0_28 = arith.constant 0 : index
    %57 = vector.load %arg1[%c2_26, %c0_27, %c0_28] : memref<4x128x128xf32, #tpu.memory_space<vmem>>, vector<1x128x128xf32>
    %58 = vector.shape_cast %57 : vector<1x128x128xf32> to vector<128x128xf32>
    %cst_29 = arith.constant dense<0.000000e+00> : vector<8x128xf32>
    %59 = tpu.matmul %56, %58, %cst_29 {dimension_numbers = #tpu.dot_dimension_numbers<[1], [0], [0], [1], [0, 0, 1, 1], [], []>} : vector<8x128xf32>, vector<128x128xf32>, vector<8x128xf32> -> vector<8x128xf32>
    %c6 = arith.constant 6 : index
    %c0_30 = arith.constant 0 : index
    %60 = vector.load %arg2[%c6, %c0_30] : memref<10x128xf32, #tpu.memory_space<vmem>>, vector<1x128xf32>
    %61 = vector.broadcast %60 : vector<1x128xf32> to vector<8x128xf32>
    %62 = arith.addf %59, %61 : vector<8x128xf32>
    %c7 = arith.constant 7 : index
    %c0_31 = arith.constant 0 : index
    %63 = vector.load %arg2[%c7, %c0_31] : memref<10x128xf32, #tpu.memory_space<vmem>>, vector<1x128xf32>
    %c8 = arith.constant 8 : index
    %c0_32 = arith.constant 0 : index
    %64 = vector.load %arg2[%c8, %c0_32] : memref<10x128xf32, #tpu.memory_space<vmem>>, vector<1x128xf32>
    %cst_33 = arith.constant dense<0.000000e+00> : vector<128xf32>
    %65 = vector.multi_reduction <add>, %62, %cst_33 [0] : vector<8x128xf32> to vector<128xf32>
    %66 = vector.shape_cast %65 : vector<128xf32> to vector<1x128xf32>
    %cst_34 = arith.constant 1.250000e-01 : f32
    %67 = vector.broadcast %cst_34 : f32 to vector<1x128xf32>
    %68 = arith.mulf %66, %67 : vector<1x128xf32>
    %69 = vector.broadcast %68 : vector<1x128xf32> to vector<8x128xf32>
    %70 = arith.subf %62, %69 : vector<8x128xf32>
    %71 = arith.mulf %70, %70 : vector<8x128xf32>
    %cst_35 = arith.constant dense<0.000000e+00> : vector<128xf32>
    %72 = vector.multi_reduction <add>, %71, %cst_35 [0] : vector<8x128xf32> to vector<128xf32>
    %73 = vector.shape_cast %72 : vector<128xf32> to vector<1x128xf32>
    %cst_36 = arith.constant 1.250000e-01 : f32
    %74 = vector.broadcast %cst_36 : f32 to vector<1x128xf32>
    %75 = arith.mulf %73, %74 : vector<1x128xf32>
    %cst_37 = arith.constant 9.99999974E-6 : f32
    %76 = vector.broadcast %cst_37 : f32 to vector<1x128xf32>
    %77 = arith.addf %75, %76 : vector<1x128xf32>
    %78 = math.rsqrt %77 : vector<1x128xf32>
    %79 = arith.mulf %63, %78 : vector<1x128xf32>
    %80 = vector.broadcast %79 : vector<1x128xf32> to vector<8x128xf32>
    %81 = arith.mulf %70, %80 : vector<8x128xf32>
    %82 = vector.broadcast %64 : vector<1x128xf32> to vector<8x128xf32>
    %83 = arith.addf %81, %82 : vector<8x128xf32>
    %cst_38 = arith.constant 0.000000e+00 : f32
    %84 = vector.broadcast %cst_38 : f32 to vector<8x128xf32>
    %85 = arith.maximumf %83, %84 : vector<8x128xf32>
    %c3_39 = arith.constant 3 : index
    %c0_40 = arith.constant 0 : index
    %c0_41 = arith.constant 0 : index
    %86 = vector.load %arg1[%c3_39, %c0_40, %c0_41] : memref<4x128x128xf32, #tpu.memory_space<vmem>>, vector<1x128x128xf32>
    %87 = vector.shape_cast %86 : vector<1x128x128xf32> to vector<128x128xf32>
    %cst_42 = arith.constant dense<0.000000e+00> : vector<8x128xf32>
    %88 = tpu.matmul %85, %87, %cst_42 {dimension_numbers = #tpu.dot_dimension_numbers<[1], [0], [0], [1], [0, 0, 1, 1], [], []>} : vector<8x128xf32>, vector<128x128xf32>, vector<8x128xf32> -> vector<8x128xf32>
    %c9 = arith.constant 9 : index
    %c0_43 = arith.constant 0 : index
    %89 = vector.load %arg2[%c9, %c0_43] : memref<10x128xf32, #tpu.memory_space<vmem>>, vector<1x128xf32>
    %90 = vector.broadcast %89 : vector<1x128xf32> to vector<8x128xf32>
    %91 = arith.addf %88, %90 : vector<8x128xf32>
    %c0_44 = arith.constant 0 : index
    %c0_45 = arith.constant 0 : index
    %92 = vector.load %arg3[%c0_44, %c0_45] : memref<8x128xf32, #tpu.memory_space<vmem>>, vector<8x128xf32>
    tpu.vector_store %arg3[%c0_44, %c0_45], %91 {strides = array<i32>} : memref<8x128xf32, #tpu.memory_space<vmem>>, vector<8x128xf32>,
    return
  }
}

</mosaic_0001>

<llo_original>
// kernel: test_model_forward.1
$region0: #{test_model_forward.1}
  #allocation0 [shape = 'u32[]', space=smem, size = 0x4, offset = 0x4, fixed_abs, tag = 'smem constant byte address 0x4 - core index']
  #allocation1 [shape = 'u32[144,128]{1,0:T(1,128)}', space=vmem, size = 0x12000, scoped, tag = 'internal scratch']
  %s0 = inlined_call_operand.vmem [shape: f32[8,128], index: 0, kind: input, shape index: {}]
  %s1 = inlined_call_operand.hbm [shape: f32[4,128,128], index: 1, kind: input, shape index: {}]
  %s2 = inlined_call_operand.vmem [shape: f32[10,128], index: 2, kind: input, shape index: {}]
  %s3 = inlined_call_operand.vmem [shape: f32[8,128], index: 3, kind: output, shape index: {}]
  %s4 = sld [smem:[#allocation0]]
  $region26: #{test_model_forward.1} parent=0
    _
  %s6 = ssub.s32 1, %s4
  %s7 = scalar_select 0, %s6, %s4
  $region1: #{test_model_forward.1} parent=0
    #allocation2 [shape = 'u8[262144]{0}', space=vmem, size = 0x40000, scoped, tag = 'input window, operand 1, single buffered']
    #allocation3 [shape = 's32[1]{0}', space=sflag, size = 0x4, scoped, tag = 'scoped memory for test_model_forward.1']
    %8 = vsyncpa [#allocation3], 0
    // Predicated region
    $region2: #{test_model_forward.1} parent=1 // pred_check
      _
    $region3: #{test_model_forward.1} parent=1 // pred_check_branch
      %10 = sbr.rel (0) target = $region5
    $region4: #{test_model_forward.1} parent=1 // pred_region
      _
    $region5: #{test_model_forward.1} parent=1 // pred_fallthru
      _
    // Predicated region
    $region6: #{test_model_forward.1} parent=1 // pred_check
      _
    $region7: #{test_model_forward.1} parent=1 // pred_check_branch
      %12 = sbr.rel (0) target = $region9
    $region8: #{test_model_forward.1} parent=1 // pred_region
      %s14 = ssub.s32 8192, 8192
      %15 = vsyncadd [#allocation3], %s14
      %s16 = sshll.u32 [#allocation2], 4
      %s17 = int_to_ptr.vmem [resolvable:$true] %s16
      %22 = dma.hbm_to_vmem [thread:$0]  %s1, 8192, %s17, [#allocation3], 128, 128, 8
    $region9: #{test_model_forward.1} parent=1 // pred_fallthru
      _
    // Predicated region
    $region10: #{test_model_forward.1} parent=1 // pred_check
      _
    $region11: #{test_model_forward.1} parent=1 // pred_check_branch
      %24 = sbr.rel (0) target = $region13
    $region12: #{test_model_forward.1} parent=1 // pred_region
      _
    $region13: #{test_model_forward.1} parent=1 // pred_fallthru
      _
    // Predicated region
    $region14: #{test_model_forward.1} parent=1 // pred_check
      _
    $region15: #{test_model_forward.1} parent=1 // pred_check_branch
      %26 = sbr.rel (0) target = $region17
    $region16: #{test_model_forward.1} parent=1 // pred_region
      %27 = dma.done [#allocation3], 8192
    $region17: #{test_model_forward.1} parent=1 // pred_fallthru
      _
    %v28 = vld [vmem:[%s0] sm:$0xff]
    %v29 = vld [vmem:[#allocation2] sm:$0xff]
    %v30 = vld [vmem:[#allocation2 + $0x8] sm:$0xff]
    %v31 = vld [vmem:[#allocation2 + $0x10] sm:$0xff]
    %v32 = vld [vmem:[#allocation2 + $0x18] sm:$0xff]
    %v33 = vld [vmem:[#allocation2 + $0x20] sm:$0xff]
    %v34 = vld [vmem:[#allocation2 + $0x28] sm:$0xff]
    %v35 = vld [vmem:[#allocation2 + $0x30] sm:$0xff]
    %v36 = vld [vmem:[#allocation2 + $0x38] sm:$0xff]
    %v37 = vld [vmem:[#allocation2 + $0x40] sm:$0xff]
    %v38 = vld [vmem:[#allocation2 + $0x48] sm:$0xff]
    %v39 = vld [vmem:[#allocation2 + $0x50] sm:$0xff]
    %v40 = vld [vmem:[#allocation2 + $0x58] sm:$0xff]
    %v41 = vld [vmem:[#allocation2 + $0x60] sm:$0xff]
    %v42 = vld [vmem:[#allocation2 + $0x68] sm:$0xff]
    %v43 = vld [vmem:[#allocation2 + $0x70] sm:$0xff]
    %v44 = vld [vmem:[#allocation2 + $0x78] sm:$0xff]
    %v45 = vld [vmem:[%s2] sm:$0x1]
    %v46 = vlaneseq
    %v47 = vshrl.u32 %v46, 7
    %v48 = vsub.s32 0, %v47
    %v49 = vrot.slane %v45, %v48
    %50 = vmatprep.subr.mxu0 0.0
    %51 = vmatpush1.msra.mxu0 %v44
    %52 = vmatprep.subr.mxu0 0.0
    %53 = vmatpush1.msra.mxu0 %v43
    %54 = vmatprep.subr.mxu0 0.0
    %55 = vmatpush1.msra.mxu0 %v42
    %56 = vmatprep.subr.mxu0 0.0
    %57 = vmatpush1.msra.mxu0 %v41
    %58 = vmatprep.subr.mxu0 0.0
    %59 = vmatpush1.msra.mxu0 %v40
    %60 = vmatprep.subr.mxu0 0.0
    %61 = vmatpush1.msra.mxu0 %v39
    %62 = vmatprep.subr.mxu0 0.0
    %63 = vmatpush1.msra.mxu0 %v38
    %64 = vmatprep.subr.mxu0 0.0
    %65 = vmatpush1.msra.mxu0 %v37
    %66 = vmatprep.subr.mxu0 0.0
    %67 = vmatpush1.msra.mxu0 %v36
    %68 = vmatprep.subr.mxu0 0.0
    %69 = vmatpush1.msra.mxu0 %v35
    %70 = vmatprep.subr.mxu0 0.0
    %71 = vmatpush1.msra.mxu0 %v34
    %72 = vmatprep.subr.mxu0 0.0
    %73 = vmatpush1.msra.mxu0 %v33
    %74 = vmatprep.subr.mxu0 0.0
    %75 = vmatpush1.msra.mxu0 %v32
    %76 = vmatprep.subr.mxu0 0.0
    %77 = vmatpush1.msra.mxu0 %v31
    %78 = vmatprep.subr.mxu0 0.0
    %79 = vmatpush1.msra.mxu0 %v30
    %80 = vmatprep.subr.mxu0 0.0
    %81 = vmatpush1.msra.mxu0 %v29
    %82 = vmatprep.subr.mxu0 0.0
    %83 = vmatpush2.msra.mxu0 0.0
    %84 = vmatprep.subr.mxu0 0.0
    %85 = vmatpush2.msra.mxu0 0.0
    %86 = vmatprep.subr.mxu0 0.0
    %87 = vmatpush2.msra.mxu0 0.0
    %88 = vmatprep.subr.mxu0 0.0
    %89 = vmatpush2.msra.mxu0 0.0
    %90 = vmatprep.subr.mxu0 0.0
    %91 = vmatpush2.msra.mxu0 0.0
    %92 = vmatprep.subr.mxu0 0.0
    %93 = vmatpush2.msra.mxu0 0.0
    %94 = vmatprep.subr.mxu0 0.0
    %95 = vmatpush2.msra.mxu0 0.0
    %96 = vmatprep.subr.mxu0 0.0
    %97 = vmatpush2.msra.mxu0 0.0
    %98 = vmatprep.subr.mxu0 0.0
    %99 = vmatpush2.msra.mxu0 0.0
    %100 = vmatprep.subr.mxu0 0.0
    %101 = vmatpush2.msra.mxu0 0.0
    %102 = vmatprep.subr.mxu0 0.0
    %103 = vmatpush2.msra.mxu0 0.0
    %104 = vmatprep.subr.mxu0 0.0
    %105 = vmatpush2.msra.mxu0 0.0
    %106 = vmatprep.subr.mxu0 0.0
    %107 = vmatpush2.msra.mxu0 0.0
    %108 = vmatprep.subr.mxu0 0.0
    %109 = vmatpush2.msra.mxu0 0.0
    %110 = vmatprep.subr.mxu0 0.0
    %111 = vmatpush2.msra.mxu0 0.0
    %112 = vmatprep.subr.mxu0 0.0
    %113 = vmatpush2.msra.mxu0 0.0
    %114 = vmatprep.mubr.f32.mxu0 0.0
    %115 = vmatmul.mubr.f32.gmra.mxu0 %v28
    %v116 = vpop.f32.mrf.mxu0
    %v117 = vadd.f32 %v49, %v116
    %v118 = vpop.f32.mrf.mxu0
    %119 = vdwg.mxu0
    %v120 = vld [vmem:[%s2 + $0x1] sm:$0x1]
    %v121 = vld [vmem:[%s2 + $0x2] sm:$0x1]
    %v122 = vrot.slane %v117, 4
    %v123 = vadd.f32 %v117, %v122
    %v124 = vrot.slane %v123, 2
    %v125 = vadd.f32 %v123, %v124
    %v126 = vrot.slane %v125, 1
    %v127 = vadd.f32 %v125, %v126
    %v128 = vmul.f32 %v127, 0.125
    %v129 = vsub.f32 %v117, %v128
    %v130 = vmul.f32 %v129, %v129
    %v131 = vrot.slane %v130, 4
    %v132 = vadd.f32 %v130, %v131
    %v133 = vrot.slane %v132, 2
    %v134 = vadd.f32 %v132, %v133
    %v135 = vrot.slane %v134, 1
    %v136 = vadd.f32 %v134, %v135
    %v137 = vmul.f32 %v136, 0.125
    %v138 = vadd.f32 %v137, 1e-05
    %v139 = vrsqrt.pop %v138
    %v140 = vmul.f32 %v120, %v139
    %v141 = vlaneseq
    %v142 = vshrl.u32 %v141, 7
    %v143 = vsub.s32 0, %v142
    %v144 = vrot.slane %v140, %v143
    %v145 = vmul.f32 %v129, %v144
    %v146 = vlaneseq
    %v147 = vshrl.u32 %v146, 7
    %v148 = vsub.s32 0, %v147
    %v149 = vrot.slane %v121, %v148
    %v150 = vadd.f32 %v145, %v149
    %v151 = vmax.f32 %v150, 0.0
    %s152 = scalar_lea.vmem [#allocation2], 128
    %v153 = vld [vmem:[%s152] sm:$0xff]
    %v154 = vld [vmem:[%s152 + $0x8] sm:$0xff]
    %v155 = vld [vmem:[%s152 + $0x10] sm:$0xff]
    %v156 = vld [vmem:[%s152 + $0x18] sm:$0xff]
    %v157 = vld [vmem:[%s152 + $0x20] sm:$0xff]
    %v158 = vld [vmem:[%s152 + $0x28] sm:$0xff]
    %v159 = vld [vmem:[%s152 + $0x30] sm:$0xff]
    %v160 = vld [vmem:[%s152 + $0x38] sm:$0xff]
    %v161 = vld [vmem:[%s152 + $0x40] sm:$0xff]
    %v162 = vld [vmem:[%s152 + $0x48] sm:$0xff]
    %v163 = vld [vmem:[%s152 + $0x50] sm:$0xff]
    %v164 = vld [vmem:[%s152 + $0x58] sm:$0xff]
    %v165 = vld [vmem:[%s152 + $0x60] sm:$0xff]
    %v166 = vld [vmem:[%s152 + $0x68] sm:$0xff]
    %v167 = vld [vmem:[%s152 + $0x70] sm:$0xff]
    %v168 = vld [vmem:[%s152 + $0x78] sm:$0xff]
    %v169 = vld [vmem:[%s2 + $0x3] sm:$0x1]
    %v170 = vlaneseq
    %v171 = vshrl.u32 %v170, 7
    %v172 = vsub.s32 0, %v171
    %v173 = vrot.slane %v169, %v172
    %174 = vmatprep.subr.mxu0 0.0
    %175 = vmatpush1.msra.mxu0 %v168
    %176 = vmatprep.subr.mxu0 0.0
    %177 = vmatpush1.msra.mxu0 %v167
    %178 = vmatprep.subr.mxu0 0.0
    %179 = vmatpush1.msra.mxu0 %v166
    %180 = vmatprep.subr.mxu0 0.0
    %181 = vmatpush1.msra.mxu0 %v165
    %182 = vmatprep.subr.mxu0 0.0
    %183 = vmatpush1.msra.mxu0 %v164
    %184 = vmatprep.subr.mxu0 0.0
    %185 = vmatpush1.msra.mxu0 %v163
    %186 = vmatprep.subr.mxu0 0.0
    %187 = vmatpush1.msra.mxu0 %v162
    %188 = vmatprep.subr.mxu0 0.0
    %189 = vmatpush1.msra.mxu0 %v161
    %190 = vmatprep.subr.mxu0 0.0
    %191 = vmatpush1.msra.mxu0 %v160
    %192 = vmatprep.subr.mxu0 0.0
    %193 = vmatpush1.msra.mxu0 %v159
    %194 = vmatprep.subr.mxu0 0.0
    %195 = vmatpush1.msra.mxu0 %v158
    %196 = vmatprep.subr.mxu0 0.0
    %197 = vmatpush1.msra.mxu0 %v157
    %198 = vmatprep.subr.mxu0 0.0
    %199 = vmatpush1.msra.mxu0 %v156
    %200 = vmatprep.subr.mxu0 0.0
    %201 = vmatpush1.msra.mxu0 %v155
    %202 = vmatprep.subr.mxu0 0.0
    %203 = vmatpush1.msra.mxu0 %v154
    %204 = vmatprep.subr.mxu0 0.0
    %205 = vmatpush1.msra.mxu0 %v153
    %206 = vmatprep.subr.mxu0 0.0
    %207 = vmatpush2.msra.mxu0 0.0
    %208 = vmatprep.subr.mxu0 0.0
    %209 = vmatpush2.msra.mxu0 0.0
    %210 = vmatprep.subr.mxu0 0.0
    %211 = vmatpush2.msra.mxu0 0.0
    %212 = vmatprep.subr.mxu0 0.0
    %213 = vmatpush2.msra.mxu0 0.0
    %214 = vmatprep.subr.mxu0 0.0
    %215 = vmatpush2.msra.mxu0 0.0
    %216 = vmatprep.subr.mxu0 0.0
    %217 = vmatpush2.msra.mxu0 0.0
    %218 = vmatprep.subr.mxu0 0.0
    %219 = vmatpush2.msra.mxu0 0.0
    %220 = vmatprep.subr.mxu0 0.0
    %221 = vmatpush2.msra.mxu0 0.0
    %222 = vmatprep.subr.mxu0 0.0
    %223 = vmatpush2.msra.mxu0 0.0
    %224 = vmatprep.subr.mxu0 0.0
    %225 = vmatpush2.msra.mxu0 0.0
    %226 = vmatprep.subr.mxu0 0.0
    %227 = vmatpush2.msra.mxu0 0.0
    %228 = vmatprep.subr.mxu0 0.0
    %229 = vmatpush2.msra.mxu0 0.0
    %230 = vmatprep.subr.mxu0 0.0
    %231 = vmatpush2.msra.mxu0 0.0
    %232 = vmatprep.subr.mxu0 0.0
    %233 = vmatpush2.msra.mxu0 0.0
    %234 = vmatprep.subr.mxu0 0.0
    %235 = vmatpush2.msra.mxu0 0.0
    %236 = vmatprep.subr.mxu0 0.0
    %237 = vmatpush2.msra.mxu0 0.0
    %238 = vmatprep.mubr.f32.mxu0 0.0
    %239 = vmatmul.mubr.f32.gmra.mxu0 %v151
    %v240 = vpop.f32.mrf.mxu0
    %v241 = vadd.f32 %v173, %v240
    %v242 = vpop.f32.mrf.mxu0
    %243 = vdwg.mxu0
    %v244 = vld [vmem:[%s2 + $0x4] sm:$0x1]
    %v245 = vld [vmem:[%s2 + $0x5] sm:$0x1]
    %v246 = vrot.slane %v241, 4
    %v247 = vadd.f32 %v241, %v246
    %v248 = vrot.slane %v247, 2
    %v249 = vadd.f32 %v247, %v248
    %v250 = vrot.slane %v249, 1
    %v251 = vadd.f32 %v249, %v250
    %v252 = vmul.f32 %v251, 0.125
    %v253 = vsub.f32 %v241, %v252
    %v254 = vmul.f32 %v253, %v253
    %v255 = vrot.slane %v254, 4
    %v256 = vadd.f32 %v254, %v255
    %v257 = vrot.slane %v256, 2
    %v258 = vadd.f32 %v256, %v257
    %v259 = vrot.slane %v258, 1
    %v260 = vadd.f32 %v258, %v259
    %v261 = vmul.f32 %v260, 0.125
    %v262 = vadd.f32 %v261, 1e-05
    %v263 = vrsqrt.pop %v262
    %v264 = vmul.f32 %v244, %v263
    %v265 = vlaneseq
    %v266 = vshrl.u32 %v265, 7
    %v267 = vsub.s32 0, %v266
    %v268 = vrot.slane %v264, %v267
    %v269 = vmul.f32 %v253, %v268
    %v270 = vlaneseq
    %v271 = vshrl.u32 %v270, 7
    %v272 = vsub.s32 0, %v271
    %v273 = vrot.slane %v245, %v272
    %v274 = vadd.f32 %v269, %v273
    %s275 = scalar_lea.vmem [#allocation2], 256
    %v276 = vld [vmem:[%s275] sm:$0xff]
    %v277 = vld [vmem:[%s275 + $0x8] sm:$0xff]
    %v278 = vld [vmem:[%s275 + $0x10] sm:$0xff]
    %v279 = vld [vmem:[%s275 + $0x18] sm:$0xff]
    %v280 = vld [vmem:[%s275 + $0x20] sm:$0xff]
    %v281 = vld [vmem:[%s275 + $0x28] sm:$0xff]
    %v282 = vld [vmem:[%s275 + $0x30] sm:$0xff]
    %v283 = vld [vmem:[%s275 + $0x38] sm:$0xff]
    %v284 = vld [vmem:[%s275 + $0x40] sm:$0xff]
    %v285 = vld [vmem:[%s275 + $0x48] sm:$0xff]
    %v286 = vld [vmem:[%s275 + $0x50] sm:$0xff]
    %v287 = vld [vmem:[%s275 + $0x58] sm:$0xff]
    %v288 = vld [vmem:[%s275 + $0x60] sm:$0xff]
    %v289 = vld [vmem:[%s275 + $0x68] sm:$0xff]
    %v290 = vld [vmem:[%s275 + $0x70] sm:$0xff]
    %v291 = vld [vmem:[%s275 + $0x78] sm:$0xff]
    %v292 = vld [vmem:[%s2 + $0x6] sm:$0x1]
    %v293 = vlaneseq
    %v294 = vshrl.u32 %v293, 7
    %v295 = vsub.s32 0, %v294
    %v296 = vrot.slane %v292, %v295
    %297 = vmatprep.subr.mxu0 0.0
    %298 = vmatpush1.msra.mxu0 %v291
    %299 = vmatprep.subr.mxu0 0.0
    %300 = vmatpush1.msra.mxu0 %v290
    %301 = vmatprep.subr.mxu0 0.0
    %302 = vmatpush1.msra.mxu0 %v289
    %303 = vmatprep.subr.mxu0 0.0
    %304 = vmatpush1.msra.mxu0 %v288
    %305 = vmatprep.subr.mxu0 0.0
    %306 = vmatpush1.msra.mxu0 %v287
    %307 = vmatprep.subr.mxu0 0.0
    %308 = vmatpush1.msra.mxu0 %v286
    %309 = vmatprep.subr.mxu0 0.0
    %310 = vmatpush1.msra.mxu0 %v285
    %311 = vmatprep.subr.mxu0 0.0
    %312 = vmatpush1.msra.mxu0 %v284
    %313 = vmatprep.subr.mxu0 0.0
    %314 = vmatpush1.msra.mxu0 %v283
    %315 = vmatprep.subr.mxu0 0.0
    %316 = vmatpush1.msra.mxu0 %v282
    %317 = vmatprep.subr.mxu0 0.0
    %318 = vmatpush1.msra.mxu0 %v281
    %319 = vmatprep.subr.mxu0 0.0
    %320 = vmatpush1.msra.mxu0 %v280
    %321 = vmatprep.subr.mxu0 0.0
    %322 = vmatpush1.msra.mxu0 %v279
    %323 = vmatprep.subr.mxu0 0.0
    %324 = vmatpush1.msra.mxu0 %v278
    %325 = vmatprep.subr.mxu0 0.0
    %326 = vmatpush1.msra.mxu0 %v277
    %327 = vmatprep.subr.mxu0 0.0
    %328 = vmatpush1.msra.mxu0 %v276
    %329 = vmatprep.subr.mxu0 0.0
    %330 = vmatpush2.msra.mxu0 0.0
    %331 = vmatprep.subr.mxu0 0.0
    %332 = vmatpush2.msra.mxu0 0.0
    %333 = vmatprep.subr.mxu0 0.0
    %334 = vmatpush2.msra.mxu0 0.0
    %335 = vmatprep.subr.mxu0 0.0
    %336 = vmatpush2.msra.mxu0 0.0
    %337 = vmatprep.subr.mxu0 0.0
    %338 = vmatpush2.msra.mxu0 0.0
    %339 = vmatprep.subr.mxu0 0.0
    %340 = vmatpush2.msra.mxu0 0.0
    %341 = vmatprep.subr.mxu0 0.0
    %342 = vmatpush2.msra.mxu0 0.0
    %343 = vmatprep.subr.mxu0 0.0
    %344 = vmatpush2.msra.mxu0 0.0
    %345 = vmatprep.subr.mxu0 0.0
    %346 = vmatpush2.msra.mxu0 0.0
    %347 = vmatprep.subr.mxu0 0.0
    %348 = vmatpush2.msra.mxu0 0.0
    %349 = vmatprep.subr.mxu0 0.0
    %350 = vmatpush2.msra.mxu0 0.0
    %351 = vmatprep.subr.mxu0 0.0
    %352 = vmatpush2.msra.mxu0 0.0
    %353 = vmatprep.subr.mxu0 0.0
    %354 = vmatpush2.msra.mxu0 0.0
    %355 = vmatprep.subr.mxu0 0.0
    %356 = vmatpush2.msra.mxu0 0.0
    %357 = vmatprep.subr.mxu0 0.0
    %358 = vmatpush2.msra.mxu0 0.0
    %359 = vmatprep.subr.mxu0 0.0
    %360 = vmatpush2.msra.mxu0 0.0
    %361 = vmatprep.mubr.f32.mxu0 0.0
    %362 = vmatmul.mubr.f32.gmra.mxu0 %v274
    %v363 = vpop.f32.mrf.mxu0
    %v364 = vadd.f32 %v296, %v363
    %v365 = vpop.f32.mrf.mxu0
    %366 = vdwg.mxu0
    %v367 = vld [vmem:[%s2 + $0x7] sm:$0x1]
    %v368 = vld [vmem:[%s2 + $0x8] sm:$0x1]
    %v369 = vrot.slane %v364, 4
    %v370 = vadd.f32 %v364, %v369
    %v371 = vrot.slane %v370, 2
    %v372 = vadd.f32 %v370, %v371
    %v373 = vrot.slane %v372, 1
    %v374 = vadd.f32 %v372, %v373
    %v375 = vmul.f32 %v374, 0.125
    %v376 = vsub.f32 %v364, %v375
    %v377 = vmul.f32 %v376, %v376
    %v378 = vrot.slane %v377, 4
    %v379 = vadd.f32 %v377, %v378
    %v380 = vrot.slane %v379, 2
    %v381 = vadd.f32 %v379, %v380
    %v382 = vrot.slane %v381, 1
    %v383 = vadd.f32 %v381, %v382
    %v384 = vmul.f32 %v383, 0.125
    %v385 = vadd.f32 %v384, 1e-05
    %v386 = vrsqrt.pop %v385
    %v387 = vmul.f32 %v367, %v386
    %v388 = vlaneseq
    %v389 = vshrl.u32 %v388, 7
    %v390 = vsub.s32 0, %v389
    %v391 = vrot.slane %v387, %v390
    %v392 = vmul.f32 %v376, %v391
    %v393 = vlaneseq
    %v394 = vshrl.u32 %v393, 7
    %v395 = vsub.s32 0, %v394
    %v396 = vrot.slane %v368, %v395
    %v397 = vadd.f32 %v392, %v396
    %v398 = vmax.f32 %v397, 0.0
    %s399 = scalar_lea.vmem [#allocation2], 384
    %v400 = vld [vmem:[%s399] sm:$0xff]
    %v401 = vld [vmem:[%s399 + $0x8] sm:$0xff]
    %v402 = vld [vmem:[%s399 + $0x10] sm:$0xff]
    %v403 = vld [vmem:[%s399 + $0x18] sm:$0xff]
    %v404 = vld [vmem:[%s399 + $0x20] sm:$0xff]
    %v405 = vld [vmem:[%s399 + $0x28] sm:$0xff]
    %v406 = vld [vmem:[%s399 + $0x30] sm:$0xff]
    %v407 = vld [vmem:[%s399 + $0x38] sm:$0xff]
    %v408 = vld [vmem:[%s399 + $0x40] sm:$0xff]
    %v409 = vld [vmem:[%s399 + $0x48] sm:$0xff]
    %v410 = vld [vmem:[%s399 + $0x50] sm:$0xff]
    %v411 = vld [vmem:[%s399 + $0x58] sm:$0xff]
    %v412 = vld [vmem:[%s399 + $0x60] sm:$0xff]
    %v413 = vld [vmem:[%s399 + $0x68] sm:$0xff]
    %v414 = vld [vmem:[%s399 + $0x70] sm:$0xff]
    %v415 = vld [vmem:[%s399 + $0x78] sm:$0xff]
    %v416 = vld [vmem:[%s2 + $0x9] sm:$0x1]
    %v417 = vlaneseq
    %v418 = vshrl.u32 %v417, 7
    %v419 = vsub.s32 0, %v418
    %v420 = vrot.slane %v416, %v419
    %421 = vmatprep.subr.mxu0 0.0
    %422 = vmatpush1.msra.mxu0 %v415
    %423 = vmatprep.subr.mxu0 0.0
    %424 = vmatpush1.msra.mxu0 %v414
    %425 = vmatprep.subr.mxu0 0.0
    %426 = vmatpush1.msra.mxu0 %v413
    %427 = vmatprep.subr.mxu0 0.0
    %428 = vmatpush1.msra.mxu0 %v412
    %429 = vmatprep.subr.mxu0 0.0
    %430 = vmatpush1.msra.mxu0 %v411
    %431 = vmatprep.subr.mxu0 0.0
    %432 = vmatpush1.msra.mxu0 %v410
    %433 = vmatprep.subr.mxu0 0.0
    %434 = vmatpush1.msra.mxu0 %v409
    %435 = vmatprep.subr.mxu0 0.0
    %436 = vmatpush1.msra.mxu0 %v408
    %437 = vmatprep.subr.mxu0 0.0
    %438 = vmatpush1.msra.mxu0 %v407
    %439 = vmatprep.subr.mxu0 0.0
    %440 = vmatpush1.msra.mxu0 %v406
    %441 = vmatprep.subr.mxu0 0.0
    %442 = vmatpush1.msra.mxu0 %v405
    %443 = vmatprep.subr.mxu0 0.0
    %444 = vmatpush1.msra.mxu0 %v404
    %445 = vmatprep.subr.mxu0 0.0
    %446 = vmatpush1.msra.mxu0 %v403
    %447 = vmatprep.subr.mxu0 0.0
    %448 = vmatpush1.msra.mxu0 %v402
    %449 = vmatprep.subr.mxu0 0.0
    %450 = vmatpush1.msra.mxu0 %v401
    %451 = vmatprep.subr.mxu0 0.0
    %452 = vmatpush1.msra.mxu0 %v400
    %453 = vmatprep.subr.mxu0 0.0
    %454 = vmatpush2.msra.mxu0 0.0
    %455 = vmatprep.subr.mxu0 0.0
    %456 = vmatpush2.msra.mxu0 0.0
    %457 = vmatprep.subr.mxu0 0.0
    %458 = vmatpush2.msra.mxu0 0.0
    %459 = vmatprep.subr.mxu0 0.0
    %460 = vmatpush2.msra.mxu0 0.0
    %461 = vmatprep.subr.mxu0 0.0
    %462 = vmatpush2.msra.mxu0 0.0
    %463 = vmatprep.subr.mxu0 0.0
    %464 = vmatpush2.msra.mxu0 0.0
    %465 = vmatprep.subr.mxu0 0.0
    %466 = vmatpush2.msra.mxu0 0.0
    %467 = vmatprep.subr.mxu0 0.0
    %468 = vmatpush2.msra.mxu0 0.0
    %469 = vmatprep.subr.mxu0 0.0
    %470 = vmatpush2.msra.mxu0 0.0
    %471 = vmatprep.subr.mxu0 0.0
    %472 = vmatpush2.msra.mxu0 0.0
    %473 = vmatprep.subr.mxu0 0.0
    %474 = vmatpush2.msra.mxu0 0.0
    %475 = vmatprep.subr.mxu0 0.0
    %476 = vmatpush2.msra.mxu0 0.0
    %477 = vmatprep.subr.mxu0 0.0
    %478 = vmatpush2.msra.mxu0 0.0
    %479 = vmatprep.subr.mxu0 0.0
    %480 = vmatpush2.msra.mxu0 0.0
    %481 = vmatprep.subr.mxu0 0.0
    %482 = vmatpush2.msra.mxu0 0.0
    %483 = vmatprep.subr.mxu0 0.0
    %484 = vmatpush2.msra.mxu0 0.0
    %485 = vmatprep.mubr.f32.mxu0 0.0
    %486 = vmatmul.mubr.f32.gmra.mxu0 %v398
    %v487 = vpop.f32.mrf.mxu0
    %v488 = vadd.f32 %v420, %v487
    %v489 = vpop.f32.mrf.mxu0
    %490 = vdwg.mxu0
    %491 = vst [vmem:[%s3] sm:$0xff] %v488
    // Predicated region
    $region18: #{test_model_forward.1} parent=1 // pred_check
      _
    $region19: #{test_model_forward.1} parent=1 // pred_check_branch
      %493 = sbr.rel (0) target = $region21
    $region20: #{test_model_forward.1} parent=1 // pred_region
      _
    $region21: #{test_model_forward.1} parent=1 // pred_fallthru
      _
    // Predicated region
    $region22: #{test_model_forward.1} parent=1 // pred_check
      _
    $region23: #{test_model_forward.1} parent=1 // pred_check_branch
      %495 = sbr.rel (0) target = $region25
    $region24: #{test_model_forward.1} parent=1 // pred_region
      _
    $region25: #{test_model_forward.1} parent=1 // pred_fallthru
      _
    %496 = vsyncpa [#allocation3], 1

</llo_original>
